<compile_context>
chip_gen: v6e
topology: v6e:2x2x1
jax: 0.10.0
libtpu: 0.0.40
codegen_flags: <defaults>
</compile_context>

<pallas_src>
import functools
import math

import jax
import jax.numpy as jnp
from jax.experimental import pallas as pl
from jax.experimental.pallas import tpu as pltpu


# ---------------------------------------------------------------------------
# Kernel
# ---------------------------------------------------------------------------
def _swiglu_ffn_kernel(x_ref, w13_ref, w2_ref, o_ref, acc_ref):
    """Grid = (token tiles, hidden tiles). Hidden axis (last) is the reduction axis.

    x_ref:   [tm, dim]        (bf16)
    w13_ref: [dim, 2*tn]      (bf16, fused [W1_tile | W3_tile], leading tile dim squeezed)
    w2_ref:  [tn, dim]        (bf16)
    o_ref:   [tm, dim]        (output dtype)
    acc_ref: [tm, dim]        (f32 VMEM accumulator)
    """
    j = pl.program_id(1)

    @pl.when(j == 0)
    def _():
        acc_ref[...] = jnp.zeros_like(acc_ref)

    x = x_ref[...]                                                    # [tm, dim] bf16
    # Fused W1|W3 matmul: one long MXU stream producing [tm, 2*tn] in f32.
    h = jnp.dot(x, w13_ref[...], preferred_element_type=jnp.float32)
    tn = h.shape[-1] // 2
    h1 = h[:, :tn]
    h3 = h[:, tn:]
    gated = (h1 * jax.nn.sigmoid(h1)) * h3                            # silu(h1) * h3, f32

    # Second matmul: accumulate this hidden tile's contribution to y (f32 acc).
    acc_ref[...] += jnp.dot(gated.astype(w2_ref.dtype), w2_ref[...],
                            preferred_element_type=jnp.float32)

    @pl.when(j == pl.num_programs(1) - 1)
    def _():
        o_ref[...] = acc_ref[...].astype(o_ref.dtype)


# ---------------------------------------------------------------------------
# Config / weight prep (outside the jitted forward)
# ---------------------------------------------------------------------------
def _round_up(x, m):
    return (x + m - 1) // m * m


def _vmem_capacity_bytes():
    """Physical VMEM per core; conservative (v7x-like) fallback if unqueryable."""
    try:
        return int(pltpu.get_tpu_info().vmem_capacity_bytes)
    except Exception:
        return 64 * 1024 * 1024


def choose_hidden_tile(hidden, target):
    """Largest multiple-of-128 divisor of `hidden` that is <= target (else full)."""
    if hidden <= target:
        return hidden
    for cand in range(target, 127, -128):
        if hidden % cand == 0:
            return cand
    return hidden


def select_config(hidden):
    """Per-generation (tm, tn, vmem_limit_bytes, split_single_token_tile)."""
    vmem = _vmem_capacity_bytes()
    if vmem >= 96 * 1024 * 1024:
        # v5e / v6e: 128 MiB physical VMEM -> big tiles, raise the scoped limit.
        tm, tn_target, vmem_limit, small_part = 512, 512, 100 * 1024 * 1024, False
    else:
        # v7x-like: 64 MiB physical VMEM -> trim the hidden tile, 2 TCs per chip.
        tm, tn_target, vmem_limit, small_part = 512, 256, 48 * 1024 * 1024, True
    tn = choose_hidden_tile(hidden, tn_target)
    return tm, tn, vmem_limit, small_part


def prepare_ffn_weights(w1, w2, w3, tn, weight_dtype=jnp.bfloat16):
    """One-time weight prep, OUTSIDE the jitted forward.

    w1/w3: [hidden, dim], w2: [dim, hidden] (PyTorch nn.Linear layout).
    Returns:
      w13t: [hidden//tn, dim, 2*tn] bf16 -- tile j is the contiguous block
            [W1.T[:, j*tn:(j+1)*tn] | W3.T[:, j*tn:(j+1)*tn]], so each hidden
            tile is one fully contiguous HBM DMA.
      w2t:  [hidden, dim] bf16 (W2.T); a (tn, dim) row slice is contiguous.
    """
    hidden, dim = w1.shape
    assert hidden % tn == 0
    nt = hidden // tn
    w1t = w1.T.reshape(dim, nt, tn)
    w3t = w3.T.reshape(dim, nt, tn)
    w13 = jnp.concatenate([w1t, w3t], axis=2)               # [dim, nt, 2*tn]
    w13t = jnp.transpose(w13, (1, 0, 2)).astype(weight_dtype)   # [nt, dim, 2*tn]
    w2t = w2.T.astype(weight_dtype)                              # [hidden, dim]
    return w13t, w2t


# ---------------------------------------------------------------------------
# Forward
# ---------------------------------------------------------------------------
@functools.partial(jax.jit,
                   static_argnames=("tm", "vmem_limit_bytes", "split_single_token_tile"))
def feed_forward(x, w13t, w2t, *, tm=512, vmem_limit_bytes=48 * 1024 * 1024,
                 split_single_token_tile=False):
    """x: [..., dim]; w13t: [hidden//tn, dim, 2*tn] (bf16); w2t: [hidden, dim] (bf16)."""
    orig_shape = x.shape
    orig_dtype = x.dtype
    dim = orig_shape[-1]
    hidden = w2t.shape[0]
    nt, dim_w, two_tn = w13t.shape
    tn = two_tn // 2
    assert dim_w == dim and nt * tn == hidden

    compute_dtype = w13t.dtype
    x2d = x.reshape(-1, dim).astype(compute_dtype)          # [T, dim], bf16 into the MXU
    T = x2d.shape[0]

    # Token tile: clamp for tiny inputs (16 = bf16 sublane packing), pad T up.
    tm_eff = min(tm, _round_up(T, 16))
    if split_single_token_tile and T > 16 and _round_up(T, tm_eff) // tm_eff == 1:
        # Ensure grid[0] >= 2 so the "parallel" token axis spans both v7x TensorCores.
        tm_eff = max(16, _round_up(_round_up(T, 16) // 2, 16))
    T_pad = _round_up(T, tm_eff)
    if T_pad != T:
        x2d = jnp.pad(x2d, ((0, T_pad - T), (0, 0)))

    grid = (T_pad // tm_eff, nt)

    bytes_w = (w13t.size * w13t.dtype.itemsize + w2t.size * w2t.dtype.itemsize)
    cost = pl.CostEstimate(
        flops=6 * T_pad * dim * hidden,
        transcendentals=T_pad * hidden,
        # Weights are re-streamed once per token tile (grid[0] times).
        bytes_accessed=grid[0] * bytes_w
        + T_pad * dim * (x2d.dtype.itemsize + jnp.dtype(orig_dtype).itemsize),
    )

    out2d = pl.pallas_call(
        _swiglu_ffn_kernel,
        out_shape=jax.ShapeDtypeStruct((T_pad, dim), orig_dtype),
        grid_spec=pltpu.PrefetchScalarGridSpec(
            num_scalar_prefetch=0,
            grid=grid,
            in_specs=[
                # x tile: stays resident across the whole hidden sweep (index (i, 0)).
                pl.BlockSpec((tm_eff, dim), lambda i, j: (i, 0)),
                # Fused W1|W3: one contiguous [dim, 2*tn] tile per hidden step.
                pl.BlockSpec((None, dim, 2 * tn), lambda i, j: (j, 0, 0)),
                # W2 hidden-row tile (contiguous in HBM).
                pl.BlockSpec((tn, dim), lambda i, j: (j, 0)),
            ],
            out_specs=pl.BlockSpec((tm_eff, dim), lambda i, j: (i, 0)),
            scratch_shapes=[pltpu.VMEM((tm_eff, dim), jnp.float32)],  # f32 accumulator
        ),
        compiler_params=pltpu.CompilerParams(
            dimension_semantics=("parallel", "arbitrary"),
            vmem_limit_bytes=vmem_limit_bytes,
        ),
        cost_estimate=cost,
    )(x2d, w13t, w2t)

    if T_pad != T:
        out2d = out2d[:T]
    return out2d.reshape(orig_shape)


# ---------------------------------------------------------------------------
# Param init + reference (mirrors the PyTorch module)
# ---------------------------------------------------------------------------
def make_params(key, dim, hidden_dim, multiple_of, ffn_dim_multiplier, dtype=jnp.float32):
    if ffn_dim_multiplier is not None:
        hidden_dim = int(ffn_dim_multiplier * hidden_dim)
    hidden_dim = multiple_of * ((hidden_dim + multiple_of - 1) // multiple_of)

    k1, k2, k3 = jax.random.split(key, 3)
    # nn.Linear default init: U(-1/sqrt(fan_in), 1/sqrt(fan_in)); weight shape [out, in].
    b1 = 1.0 / math.sqrt(dim)
    b2 = 1.0 / math.sqrt(hidden_dim)
    w1 = jax.random.uniform(k1, (hidden_dim, dim), dtype, minval=-b1, maxval=b1)
    w2 = jax.random.uniform(k2, (dim, hidden_dim), dtype, minval=-b2, maxval=b2)
    w3 = jax.random.uniform(k3, (hidden_dim, dim), dtype, minval=-b1, maxval=b1)
    return w1, w2, w3, hidden_dim


def reference_ffn(x, w1, w2, w3):
    """Pure-JAX f32 reference matching the PyTorch forward exactly."""
    h1 = x @ w1.T
    h3 = x @ w3.T
    return (h1 * jax.nn.sigmoid(h1) * h3) @ w2.T


# ---------------------------------------------------------------------------
# Demo
# ---------------------------------------------------------------------------
if __name__ == "__main__":
    # Small shapes: batch=2, seq=8, dim=128; hidden_dim=256 rounded to multiple_of=32.
    batch, seq, dim = 2, 8, 128
    hidden_dim_arg, multiple_of, ffn_dim_multiplier = 256, 32, None

    key = jax.random.PRNGKey(0)
    kx, kp = jax.random.split(key)
    x = jax.random.normal(kx, (batch, seq, dim), jnp.float32)
    w1, w2, w3, hidden_dim = make_params(kp, dim, hidden_dim_arg, multiple_of,
                                         ffn_dim_multiplier)

    # Per-generation tiling / VMEM config + one-time bf16 weight prep.
    tm, tn, vmem_limit, split_single = select_config(hidden_dim)
    w13t, w2t = prepare_ffn_weights(w1, w2, w3, tn, weight_dtype=jnp.bfloat16)

    out = feed_forward(x, w13t, w2t, tm=tm, vmem_limit_bytes=vmem_limit,
                       split_single_token_tile=split_single)
    out = jax.block_until_ready(out)

    ref = reference_ffn(x, w1, w2, w3)
    assert out.shape == (batch, seq, dim)
    # bf16 weights/activations with f32 accumulation vs the pure-f32 reference.
    assert jnp.allclose(out, ref, atol=2e-2, rtol=2e-2), "mismatch vs reference"

    print("KERNEL_OK")
</pallas_src>

<mosaic_0001>
module attributes {stable_mosaic.version = 11 : i64} {
  func.func @_swiglu_ffn_kernel(%arg0: i32, %arg1: i32, %arg2: memref<16x128xbf16, #tpu.memory_space<vmem>>, %arg3: memref<1x128x512xbf16, #tpu.memory_space<vmem>>, %arg4: memref<256x128xbf16, #tpu.memory_space<vmem>>, %arg5: memref<16x128xf32, #tpu.memory_space<vmem>>, %arg6: memref<16x128xf32, #tpu.memory_space<vmem>>) attributes {dimension_semantics = [#tpu.dimension_semantics<parallel>, #tpu.dimension_semantics<arbitrary>], iteration_bounds = array<i64: 1, 1>, scalar_prefetch = 0 : i64, scratch_operands = 1 : i64, tpu.core_type = #tpu.core_type<tc>, window_params = [{transform_indices = @transform_0, window_bounds = array<i64: 16, 128>}, {transform_indices = @transform_1, window_bounds = array<i64: 1, 128, 512>}, {transform_indices = @transform_2, window_bounds = array<i64: 256, 128>}, {transform_indices = @transform_3, window_bounds = array<i64: 16, 128>}]} {
    %c0_i32 = arith.constant 0 : i32
    %0 = arith.cmpi eq, %arg1, %c0_i32 : i32
    %1 = arith.extui %0 : i1 to i32
    %c0_i32_0 = arith.constant 0 : i32
    %2 = arith.cmpi ne, %1, %c0_i32_0 : i32
    scf.if %2 {
      %cst_15 = arith.constant 0.000000e+00 : f32
      %25 = vector.broadcast %cst_15 : f32 to vector<16x128xf32>
      %c0_16 = arith.constant 0 : index
      %c0_17 = arith.constant 0 : index
      %26 = vector.load %arg6[%c0_16, %c0_17] : memref<16x128xf32, #tpu.memory_space<vmem>>, vector<16x128xf32>
      tpu.vector_store %arg6[%c0_16, %c0_17], %25 {strides = array<i32>} : memref<16x128xf32, #tpu.memory_space<vmem>>, vector<16x128xf32>,
    } else {
    }
    %c0 = arith.constant 0 : index
    %c0_1 = arith.constant 0 : index
    %3 = vector.load %arg2[%c0, %c0_1] : memref<16x128xbf16, #tpu.memory_space<vmem>>, vector<16x128xbf16>
    %c0_2 = arith.constant 0 : index
    %c0_3 = arith.constant 0 : index
    %c0_4 = arith.constant 0 : index
    %4 = vector.load %arg3[%c0_2, %c0_3, %c0_4] : memref<1x128x512xbf16, #tpu.memory_space<vmem>>, vector<1x128x512xbf16>
    %5 = vector.shape_cast %4 : vector<1x128x512xbf16> to vector<128x512xbf16>
    %cst = arith.constant dense<0.000000e+00> : vector<16x512xf32>
    %6 = tpu.matmul %3, %5, %cst {dimension_numbers = #tpu.dot_dimension_numbers<[1], [0], [0], [1], [0, 0, 1, 1], [], []>} : vector<16x128xbf16>, vector<128x512xbf16>, vector<16x512xf32> -> vector<16x512xf32>
    %7 = vector.extract_strided_slice %6 {offsets = [0, 0], sizes = [16, 256], strides = [1, 1]} : vector<16x512xf32> to vector<16x256xf32>
    %8 = vector.extract_strided_slice %6 {offsets = [0, 256], sizes = [16, 256], strides = [1, 1]} : vector<16x512xf32> to vector<16x256xf32>
    %9 = arith.negf %7 : vector<16x256xf32>
    %10 = math.exp %9 : vector<16x256xf32>
    %cst_5 = arith.constant 1.000000e+00 : f32
    %11 = vector.broadcast %cst_5 : f32 to vector<16x256xf32>
    %12 = arith.addf %11, %10 : vector<16x256xf32>
    %13 = arith.divf %11, %12 : vector<16x256xf32>
    %14 = arith.mulf %7, %13 : vector<16x256xf32>
    %15 = arith.mulf %14, %8 : vector<16x256xf32>
    %c0_6 = arith.constant 0 : index
    %c0_7 = arith.constant 0 : index
    %16 = vector.load %arg6[%c0_6, %c0_7] : memref<16x128xf32, #tpu.memory_space<vmem>>, vector<16x128xf32>
    %17 = arith.truncf %15 : vector<16x256xf32> to vector<16x256xbf16>
    %c0_8 = arith.constant 0 : index
    %c0_9 = arith.constant 0 : index
    %18 = vector.load %arg4[%c0_8, %c0_9] : memref<256x128xbf16, #tpu.memory_space<vmem>>, vector<256x128xbf16>
    %cst_10 = arith.constant dense<0.000000e+00> : vector<16x128xf32>
    %19 = tpu.matmul %17, %18, %cst_10 {dimension_numbers = #tpu.dot_dimension_numbers<[1], [0], [0], [1], [0, 0, 1, 1], [], []>} : vector<16x256xbf16>, vector<256x128xbf16>, vector<16x128xf32> -> vector<16x128xf32>
    %20 = arith.addf %16, %19 : vector<16x128xf32>
    %c0_11 = arith.constant 0 : index
    %c0_12 = arith.constant 0 : index
    %21 = vector.load %arg6[%c0_11, %c0_12] : memref<16x128xf32, #tpu.memory_space<vmem>>, vector<16x128xf32>
    tpu.vector_store %arg6[%c0_11, %c0_12], %20 {strides = array<i32>} : memref<16x128xf32, #tpu.memory_space<vmem>>, vector<16x128xf32>,
    %c0_i32_13 = arith.constant 0 : i32
    %22 = arith.cmpi eq, %arg1, %c0_i32_13 : i32
    %23 = arith.extui %22 : i1 to i32
    %c0_i32_14 = arith.constant 0 : i32
    %24 = arith.cmpi ne, %23, %c0_i32_14 : i32
    scf.if %24 {
      %c0_15 = arith.constant 0 : index
      %c0_16 = arith.constant 0 : index
      %25 = vector.load %arg6[%c0_15, %c0_16] : memref<16x128xf32, #tpu.memory_space<vmem>>, vector<16x128xf32>
      %c0_17 = arith.constant 0 : index
      %c0_18 = arith.constant 0 : index
      %26 = vector.load %arg5[%c0_17, %c0_18] : memref<16x128xf32, #tpu.memory_space<vmem>>, vector<16x128xf32>
      tpu.vector_store %arg5[%c0_17, %c0_18], %25 {strides = array<i32>} : memref<16x128xf32, #tpu.memory_space<vmem>>, vector<16x128xf32>,
    } else {
    }
    return
  }
  func.func @transform_0(%arg0: i32, %arg1: i32) -> (i32, i32) {
    %c0_i32 = arith.constant 0 : i32
    %c0_i32_0 = arith.constant 0 : i32
    return %arg0, %c0_i32 : i32, i32
  }
  func.func @transform_1(%arg0: i32, %arg1: i32) -> (i32, i32, i32) {
    %c0_i32 = arith.constant 0 : i32
    %c0_i32_0 = arith.constant 0 : i32
    %c0_i32_1 = arith.constant 0 : i32
    return %arg1, %c0_i32, %c0_i32_0 : i32, i32, i32
  }
  func.func @transform_2(%arg0: i32, %arg1: i32) -> (i32, i32) {
    %c0_i32 = arith.constant 0 : i32
    %c0_i32_0 = arith.constant 0 : i32
    return %arg1, %c0_i32 : i32, i32
  }
  func.func @transform_3(%arg0: i32, %arg1: i32) -> (i32, i32) {
    %c0_i32 = arith.constant 0 : i32
    %c0_i32_0 = arith.constant 0 : i32
    return %arg0, %c0_i32 : i32, i32
  }
}

</mosaic_0001>

<llo_original>
// kernel: feed_forward.1
$region0: #{feed_forward.1}
  #allocation0 [shape = 'u32[]', space=smem, size = 0x4, offset = 0x4, fixed_abs, tag = 'smem constant byte address 0x4 - core index']
  #allocation1 [shape = 'u32[144,128]{1,0:T(1,128)}', space=vmem, size = 0x12000, scoped, tag = 'internal scratch']
  #allocation2 [shape = 'f32[16,128]{1,0:T(8,128)}', space=vmem, size = 0x2000, scoped, tag = 'scratch operand']
  %s0 = inlined_call_operand.vmem [shape: bf16[16,128], index: 0, kind: input, shape index: {}]
  %s1 = inlined_call_operand.hbm [shape: bf16[1,128,512], index: 1, kind: input, shape index: {}]
  %s2 = inlined_call_operand.hbm [shape: bf16[256,128], index: 2, kind: input, shape index: {}]
  %s3 = inlined_call_operand.hbm [shape: f32[16,128], index: 3, kind: output, shape index: {}]
  %s4 = sld [smem:[#allocation0]]
  $region38: #{feed_forward.1} parent=0
    _
  %s6 = ssub.s32 1, %s4
  %s7 = scalar_select 0, %s6, %s4
  $region1: #{feed_forward.1} parent=0
    #allocation3 [shape = 'u8[131072]{0}', space=vmem, size = 0x20000, scoped, tag = 'input window, operand 1, single buffered']
    #allocation4 [shape = 's32[1]{0}', space=sflag, size = 0x4, scoped, tag = 'scoped memory for feed_forward.1']
    #allocation5 [shape = 's32[1]{0}', space=sflag, size = 0x4, scoped, tag = 'scoped memory for feed_forward.1']
    #allocation6 [shape = 'u8[65536]{0}', space=vmem, size = 0x10000, scoped, tag = 'input window, operand 2, single buffered']
    #allocation7 [shape = 's32[1]{0}', space=sflag, size = 0x4, scoped, tag = 'scoped memory for feed_forward.1']
    #allocation8 [shape = 'u8[8192]{0}', space=vmem, size = 0x2000, scoped, tag = 'output window, operand 0, single buffered']
    %8 = vsyncpa [#allocation4], 0
    %9 = vsyncpa [#allocation7], 0
    %10 = vsyncpa [#allocation5], 0
    // Predicated region
    $region2: #{feed_forward.1} parent=1 // pred_check
      _
    $region3: #{feed_forward.1} parent=1 // pred_check_branch
      %12 = sbr.rel (0) target = $region5
    $region4: #{feed_forward.1} parent=1 // pred_region
      _
    $region5: #{feed_forward.1} parent=1 // pred_fallthru
      _
    // Predicated region
    $region6: #{feed_forward.1} parent=1 // pred_check
      _
    $region7: #{feed_forward.1} parent=1 // pred_check_branch
      %14 = sbr.rel (0) target = $region9
    $region8: #{feed_forward.1} parent=1 // pred_region
      %s16 = ssub.s32 4096, 4096
      %17 = vsyncadd [#allocation4], %s16
      %s18 = sshll.u32 [#allocation3], 4
      %s19 = int_to_ptr.vmem [resolvable:$true] %s18
      %24 = dma.hbm_to_vmem [thread:$0]  %s1, 4096, %s19, [#allocation4], 256, 256, 16
    $region9: #{feed_forward.1} parent=1 // pred_fallthru
      _
    // Predicated region
    $region10: #{feed_forward.1} parent=1 // pred_check
      _
    $region11: #{feed_forward.1} parent=1 // pred_check_branch
      %26 = sbr.rel (0) target = $region13
    $region12: #{feed_forward.1} parent=1 // pred_region
      %s28 = ssub.s32 2048, 2048
      %29 = vsyncadd [#allocation7], %s28
      %s30 = sshll.u32 [#allocation6], 4
      %s31 = int_to_ptr.vmem [resolvable:$true] %s30
      %36 = dma.hbm_to_vmem [thread:$0]  %s2, 2048, %s31, [#allocation7], 64, 64, 4
    $region13: #{feed_forward.1} parent=1 // pred_fallthru
      _
    // Predicated region
    $region14: #{feed_forward.1} parent=1 // pred_check
      _
    $region15: #{feed_forward.1} parent=1 // pred_check_branch
      %38 = sbr.rel (0) target = $region17
    $region16: #{feed_forward.1} parent=1 // pred_region
      %39 = dma.done [#allocation4], 4096
    $region17: #{feed_forward.1} parent=1 // pred_fallthru
      _
    // Predicated region
    $region18: #{feed_forward.1} parent=1 // pred_check
      _
    $region19: #{feed_forward.1} parent=1 // pred_check_branch
      %41 = sbr.rel (0) target = $region21
    $region20: #{feed_forward.1} parent=1 // pred_region
      %42 = dma.done [#allocation7], 2048
    $region21: #{feed_forward.1} parent=1 // pred_fallthru
      _
    %p44 = scmp.eq.s32.totalorder 0, 0
    // Predicated region
    $region22: #{feed_forward.1} parent=1 // pred_check
      %p45 = pneg %p44
    $region23: #{feed_forward.1} parent=1 // pred_check_branch
      %47 = sbr.rel (%p45) target = $region25
    $region24: #{feed_forward.1} parent=1 // pred_region
      %48 = vst [vmem:[#allocation2] sm:$0xff] 0.0
      %49 = vst [vmem:[#allocation2 + $0x8] sm:$0xff] 0.0
    $region25: #{feed_forward.1} parent=1 // pred_fallthru
      _
    %v50 = vld [vmem:[%s0] sm:$0xf]
    %v51 = vld [vmem:[%s0 + $0x4] sm:$0xf]
    %v52 = vld [vmem:[#allocation3] sm:$0xff]
    %v53 = vld [vmem:[#allocation3 + $0x8] sm:$0xff]
    %v54 = vld [vmem:[#allocation3 + $0x10] sm:$0xff]
    %v55 = vld [vmem:[#allocation3 + $0x18] sm:$0xff]
    %v56 = vld [vmem:[#allocation3 + $0x20] sm:$0xff]
    %v57 = vld [vmem:[#allocation3 + $0x28] sm:$0xff]
    %v58 = vld [vmem:[#allocation3 + $0x30] sm:$0xff]
    %v59 = vld [vmem:[#allocation3 + $0x38] sm:$0xff]
    %v60 = vld [vmem:[#allocation3 + $0x40] sm:$0xff]
    %v61 = vld [vmem:[#allocation3 + $0x48] sm:$0xff]
    %v62 = vld [vmem:[#allocation3 + $0x50] sm:$0xff]
    %v63 = vld [vmem:[#allocation3 + $0x58] sm:$0xff]
    %v64 = vld [vmem:[#allocation3 + $0x60] sm:$0xff]
    %v65 = vld [vmem:[#allocation3 + $0x68] sm:$0xff]
    %v66 = vld [vmem:[#allocation3 + $0x70] sm:$0xff]
    %v67 = vld [vmem:[#allocation3 + $0x78] sm:$0xff]
    %v68 = vld [vmem:[#allocation3 + $0x80] sm:$0xff]
    %v69 = vld [vmem:[#allocation3 + $0x88] sm:$0xff]
    %v70 = vld [vmem:[#allocation3 + $0x90] sm:$0xff]
    %v71 = vld [vmem:[#allocation3 + $0x98] sm:$0xff]
    %v72 = vld [vmem:[#allocation3 + $0xa0] sm:$0xff]
    %v73 = vld [vmem:[#allocation3 + $0xa8] sm:$0xff]
    %v74 = vld [vmem:[#allocation3 + $0xb0] sm:$0xff]
    %v75 = vld [vmem:[#allocation3 + $0xb8] sm:$0xff]
    %v76 = vld [vmem:[#allocation3 + $0xc0] sm:$0xff]
    %v77 = vld [vmem:[#allocation3 + $0xc8] sm:$0xff]
    %v78 = vld [vmem:[#allocation3 + $0xd0] sm:$0xff]
    %v79 = vld [vmem:[#allocation3 + $0xd8] sm:$0xff]
    %v80 = vld [vmem:[#allocation3 + $0xe0] sm:$0xff]
    %v81 = vld [vmem:[#allocation3 + $0xe8] sm:$0xff]
    %v82 = vld [vmem:[#allocation3 + $0xf0] sm:$0xff]
    %v83 = vld [vmem:[#allocation3 + $0xf8] sm:$0xff]
    %v86 = vunpack.c.l.b16 %v50
    %v87 = vunpack.c.l.b16 %v51
    %v88 = vpack.c.b16 %v87, %v86
    %v122 = vunpack.c.l.b16 %v52
    %v123 = vunpack.c.h.b16 %v52
    %v124 = vunpack.c.l.b16 %v53
    %v125 = vunpack.c.h.b16 %v53
    %v126 = vunpack.c.l.b16 %v54
    %v127 = vunpack.c.h.b16 %v54
    %v128 = vunpack.c.l.b16 %v55
    %v129 = vunpack.c.h.b16 %v55
    %v130 = vunpack.c.l.b16 %v56
    %v131 = vunpack.c.h.b16 %v56
    %v132 = vunpack.c.l.b16 %v57
    %v133 = vunpack.c.h.b16 %v57
    %v134 = vunpack.c.l.b16 %v58
    %v135 = vunpack.c.h.b16 %v58
    %v136 = vunpack.c.l.b16 %v59
    %v137 = vunpack.c.h.b16 %v59
    %v138 = vunpack.c.l.b16 %v60
    %v139 = vunpack.c.h.b16 %v60
    %v140 = vunpack.c.l.b16 %v61
    %v141 = vunpack.c.h.b16 %v61
    %v142 = vunpack.c.l.b16 %v62
    %v143 = vunpack.c.h.b16 %v62
    %v144 = vunpack.c.l.b16 %v63
    %v145 = vunpack.c.h.b16 %v63
    %v146 = vunpack.c.l.b16 %v64
    %v147 = vunpack.c.h.b16 %v64
    %v148 = vunpack.c.l.b16 %v65
    %v149 = vunpack.c.h.b16 %v65
    %v150 = vunpack.c.l.b16 %v66
    %v151 = vunpack.c.h.b16 %v66
    %v152 = vunpack.c.l.b16 %v67
    %v153 = vunpack.c.h.b16 %v67
    %v154 = vunpack.c.l.b16 %v68
    %v155 = vunpack.c.h.b16 %v68
    %v156 = vunpack.c.l.b16 %v69
    %v157 = vunpack.c.h.b16 %v69
    %v158 = vunpack.c.l.b16 %v70
    %v159 = vunpack.c.h.b16 %v70
    %v160 = vunpack.c.l.b16 %v71
    %v161 = vunpack.c.h.b16 %v71
    %v162 = vunpack.c.l.b16 %v72
    %v163 = vunpack.c.h.b16 %v72
    %v164 = vunpack.c.l.b16 %v73
    %v165 = vunpack.c.h.b16 %v73
    %v166 = vunpack.c.l.b16 %v74
    %v167 = vunpack.c.h.b16 %v74
    %v168 = vunpack.c.l.b16 %v75
    %v169 = vunpack.c.h.b16 %v75
    %v170 = vunpack.c.l.b16 %v76
    %v171 = vunpack.c.h.b16 %v76
    %v172 = vunpack.c.l.b16 %v77
    %v173 = vunpack.c.h.b16 %v77
    %v174 = vunpack.c.l.b16 %v78
    %v175 = vunpack.c.h.b16 %v78
    %v176 = vunpack.c.l.b16 %v79
    %v177 = vunpack.c.h.b16 %v79
    %v178 = vunpack.c.l.b16 %v80
    %v179 = vunpack.c.h.b16 %v80
    %v180 = vunpack.c.l.b16 %v81
    %v181 = vunpack.c.h.b16 %v81
    %v182 = vunpack.c.l.b16 %v82
    %v183 = vunpack.c.h.b16 %v82
    %v184 = vunpack.c.l.b16 %v83
    %v185 = vunpack.c.h.b16 %v83
    %v186 = vpack.c.b16 %v126, %v122
    %v187 = vpack.c.b16 %v127, %v123
    %v188 = vpack.c.b16 %v128, %v124
    %v189 = vpack.c.b16 %v129, %v125
    %v190 = vpack.c.b16 %v134, %v130
    %v191 = vpack.c.b16 %v135, %v131
    %v192 = vpack.c.b16 %v136, %v132
    %v193 = vpack.c.b16 %v137, %v133
    %v194 = vpack.c.b16 %v142, %v138
    %v195 = vpack.c.b16 %v143, %v139
    %v196 = vpack.c.b16 %v144, %v140
    %v197 = vpack.c.b16 %v145, %v141
    %v198 = vpack.c.b16 %v150, %v146
    %v199 = vpack.c.b16 %v151, %v147
    %v200 = vpack.c.b16 %v152, %v148
    %v201 = vpack.c.b16 %v153, %v149
    %v202 = vpack.c.b16 %v158, %v154
    %v203 = vpack.c.b16 %v159, %v155
    %v204 = vpack.c.b16 %v160, %v156
    %v205 = vpack.c.b16 %v161, %v157
    %v206 = vpack.c.b16 %v166, %v162
    %v207 = vpack.c.b16 %v167, %v163
    %v208 = vpack.c.b16 %v168, %v164
    %v209 = vpack.c.b16 %v169, %v165
    %v210 = vpack.c.b16 %v174, %v170
    %v211 = vpack.c.b16 %v175, %v171
    %v212 = vpack.c.b16 %v176, %v172
    %v213 = vpack.c.b16 %v177, %v173
    %v214 = vpack.c.b16 %v182, %v178
    %v215 = vpack.c.b16 %v183, %v179
    %v216 = vpack.c.b16 %v184, %v180
    %v217 = vpack.c.b16 %v185, %v181
    %250 = vmatprep.subr.bf16.mxu0 %v215
    %251 = vmatpush1.bf16.msra.mxu0 %v214
    %252 = vmatprep.subr.bf16.mxu0 %v211
    %253 = vmatpush1.bf16.msra.mxu0 %v210
    %254 = vmatprep.subr.bf16.mxu0 %v207
    %255 = vmatpush1.bf16.msra.mxu0 %v206
    %256 = vmatprep.subr.bf16.mxu0 %v203
    %257 = vmatpush1.bf16.msra.mxu0 %v202
    %258 = vmatprep.subr.bf16.mxu0 %v199
    %259 = vmatpush1.bf16.msra.mxu0 %v198
    %260 = vmatprep.subr.bf16.mxu0 %v195
    %261 = vmatpush1.bf16.msra.mxu0 %v194
    %262 = vmatprep.subr.bf16.mxu0 %v191
    %263 = vmatpush1.bf16.msra.mxu0 %v190
    %264 = vmatprep.subr.bf16.mxu0 %v187
    %265 = vmatpush1.bf16.msra.mxu0 %v186
    %266 = vmatprep.subr.bf16.mxu0 0
    %267 = vmatpush2.bf16.msra.mxu0 0
    %268 = vmatprep.subr.bf16.mxu0 0
    %269 = vmatpush2.bf16.msra.mxu0 0
    %270 = vmatprep.subr.bf16.mxu0 0
    %271 = vmatpush2.bf16.msra.mxu0 0
    %272 = vmatprep.subr.bf16.mxu0 0
    %273 = vmatpush2.bf16.msra.mxu0 0
    %274 = vmatprep.subr.bf16.mxu0 0
    %275 = vmatpush2.bf16.msra.mxu0 0
    %276 = vmatprep.subr.bf16.mxu0 0
    %277 = vmatpush2.bf16.msra.mxu0 0
    %278 = vmatprep.subr.bf16.mxu0 0
    %279 = vmatpush2.bf16.msra.mxu0 0
    %280 = vmatprep.subr.bf16.mxu0 0
    %281 = vmatpush2.bf16.msra.mxu0 0
    %282 = vmatprep.mubr.bf16.mxu0 0
    %283 = vmatmul.mubr.bf16.gmra.mxu0 %v88
    %v284 = vpop.f32.mrf.mxu0
    %v285 = vadd.f32 0.0, %v284
    %v286 = vpop.f32.mrf.mxu0
    %v287 = vadd.f32 0.0, %v286
    %v288 = vpop.f32.mrf.mxu0
    %v289 = vadd.f32 0.0, %v288
    %v290 = vpop.f32.mrf.mxu0
    %v291 = vadd.f32 0.0, %v290
    %292 = vdwg.mxu0
    %293 = vmatprep.subr.bf16.mxu0 %v217
    %294 = vmatpush1.bf16.msra.mxu0 %v216
    %295 = vmatprep.subr.bf16.mxu0 %v213
    %296 = vmatpush1.bf16.msra.mxu0 %v212
    %297 = vmatprep.subr.bf16.mxu0 %v209
    %298 = vmatpush1.bf16.msra.mxu0 %v208
    %299 = vmatprep.subr.bf16.mxu0 %v205
    %300 = vmatpush1.bf16.msra.mxu0 %v204
    %301 = vmatprep.subr.bf16.mxu0 %v201
    %302 = vmatpush1.bf16.msra.mxu0 %v200
    %303 = vmatprep.subr.bf16.mxu0 %v197
    %304 = vmatpush1.bf16.msra.mxu0 %v196
    %305 = vmatprep.subr.bf16.mxu0 %v193
    %306 = vmatpush1.bf16.msra.mxu0 %v192
    %307 = vmatprep.subr.bf16.mxu0 %v189
    %308 = vmatpush1.bf16.msra.mxu0 %v188
    %309 = vmatprep.subr.bf16.mxu0 0
    %310 = vmatpush2.bf16.msra.mxu0 0
    %311 = vmatprep.subr.bf16.mxu0 0
    %312 = vmatpush2.bf16.msra.mxu0 0
    %313 = vmatprep.subr.bf16.mxu0 0
    %314 = vmatpush2.bf16.msra.mxu0 0
    %315 = vmatprep.subr.bf16.mxu0 0
    %316 = vmatpush2.bf16.msra.mxu0 0
    %317 = vmatprep.subr.bf16.mxu0 0
    %318 = vmatpush2.bf16.msra.mxu0 0
    %319 = vmatprep.subr.bf16.mxu0 0
    %320 = vmatpush2.bf16.msra.mxu0 0
    %321 = vmatprep.subr.bf16.mxu0 0
    %322 = vmatpush2.bf16.msra.mxu0 0
    %323 = vmatprep.subr.bf16.mxu0 0
    %324 = vmatpush2.bf16.msra.mxu0 0
    %325 = vmatprep.mubr.bf16.mxu0 0
    %326 = vmatmul.mubr.bf16.gmra.mxu0 %v88
    %v327 = vpop.f32.mrf.mxu0
    %v328 = vadd.f32 0.0, %v327
    %v329 = vpop.f32.mrf.mxu0
    %v330 = vadd.f32 0.0, %v329
    %v331 = vpop.f32.mrf.mxu0
    %v332 = vadd.f32 0.0, %v331
    %v333 = vpop.f32.mrf.mxu0
    %v334 = vadd.f32 0.0, %v333
    %335 = vdwg.mxu0
    %v336 = vxor.u32 %v285, 2147483648
    %v337 = vxor.u32 %v287, 2147483648
    %v338 = vxor.u32 %v289, 2147483648
    %v339 = vxor.u32 %v291, 2147483648
    %v340 = vmul.f32 %v336, 1.442695
    %v341 = vpow.pop %v340
    %v342 = vmul.f32 %v337, 1.442695
    %v343 = vpow.pop %v342
    %v344 = vmul.f32 %v338, 1.442695
    %v345 = vpow.pop %v344
    %v346 = vmul.f32 %v339, 1.442695
    %v347 = vpow.pop %v346
    %v348 = vadd.f32 %v341, 1.0
    %v349 = vadd.f32 %v343, 1.0
    %v350 = vadd.f32 %v345, 1.0
    %v351 = vadd.f32 %v347, 1.0
    %v352 = vrcp.pop %v348
    %v353 = vmul.f32 1.0, %v352
    %v354 = vrcp.pop %v349
    %v355 = vmul.f32 1.0, %v354
    %v356 = vrcp.pop %v350
    %v357 = vmul.f32 1.0, %v356
    %v358 = vrcp.pop %v351
    %v359 = vmul.f32 1.0, %v358
    %v360 = vmul.f32 %v285, %v353
    %v361 = vmul.f32 %v287, %v355
    %v362 = vmul.f32 %v289, %v357
    %v363 = vmul.f32 %v291, %v359
    %v364 = vmul.f32 %v360, %v328
    %v365 = vmul.f32 %v361, %v330
    %v366 = vmul.f32 %v362, %v332
    %v367 = vmul.f32 %v363, %v334
    %v368 = vld [vmem:[#allocation2] sm:$0xff]
    %v369 = vld [vmem:[#allocation2 + $0x8] sm:$0xff]
    %v370 = vpack.c.bf16 %v366, %v364
    %v371 = vpack.c.bf16 %v367, %v365
    %v372 = vld [vmem:[#allocation6] sm:$0xf]
    %v373 = vld [vmem:[#allocation6 + $0x4] sm:$0xf]
    %v374 = vld [vmem:[#allocation6 + $0x8] sm:$0xf]
    %v375 = vld [vmem:[#allocation6 + $0xc] sm:$0xf]
    %v376 = vld [vmem:[#allocation6 + $0x10] sm:$0xf]
    %v377 = vld [vmem:[#allocation6 + $0x14] sm:$0xf]
    %v378 = vld [vmem:[#allocation6 + $0x18] sm:$0xf]
    %v379 = vld [vmem:[#allocation6 + $0x1c] sm:$0xf]
    %v380 = vld [vmem:[#allocation6 + $0x20] sm:$0xf]
    %v381 = vld [vmem:[#allocation6 + $0x24] sm:$0xf]
    %v382 = vld [vmem:[#allocation6 + $0x28] sm:$0xf]
    %v383 = vld [vmem:[#allocation6 + $0x2c] sm:$0xf]
    %v384 = vld [vmem:[#allocation6 + $0x30] sm:$0xf]
    %v385 = vld [vmem:[#allocation6 + $0x34] sm:$0xf]
    %v386 = vld [vmem:[#allocation6 + $0x38] sm:$0xf]
    %v387 = vld [vmem:[#allocation6 + $0x3c] sm:$0xf]
    %v388 = vld [vmem:[#allocation6 + $0x40] sm:$0xf]
    %v389 = vld [vmem:[#allocation6 + $0x44] sm:$0xf]
    %v390 = vld [vmem:[#allocation6 + $0x48] sm:$0xf]
    %v391 = vld [vmem:[#allocation6 + $0x4c] sm:$0xf]
    %v392 = vld [vmem:[#allocation6 + $0x50] sm:$0xf]
    %v393 = vld [vmem:[#allocation6 + $0x54] sm:$0xf]
    %v394 = vld [vmem:[#allocation6 + $0x58] sm:$0xf]
    %v395 = vld [vmem:[#allocation6 + $0x5c] sm:$0xf]
    %v396 = vld [vmem:[#allocation6 + $0x60] sm:$0xf]
    %v397 = vld [vmem:[#allocation6 + $0x64] sm:$0xf]
    %v398 = vld [vmem:[#allocation6 + $0x68] sm:$0xf]
    %v399 = vld [vmem:[#allocation6 + $0x6c] sm:$0xf]
    %v400 = vld [vmem:[#allocation6 + $0x70] sm:$0xf]
    %v401 = vld [vmem:[#allocation6 + $0x74] sm:$0xf]
    %v402 = vld [vmem:[#allocation6 + $0x78] sm:$0xf]
    %v403 = vld [vmem:[#allocation6 + $0x7c] sm:$0xf]
    %v436 = vunpack.c.l.b16 %v372
    %v437 = vunpack.c.l.b16 %v373
    %v438 = vunpack.c.l.b16 %v374
    %v439 = vunpack.c.l.b16 %v375
    %v440 = vunpack.c.l.b16 %v376
    %v441 = vunpack.c.l.b16 %v377
    %v442 = vunpack.c.l.b16 %v378
    %v443 = vunpack.c.l.b16 %v379
    %v444 = vunpack.c.l.b16 %v380
    %v445 = vunpack.c.l.b16 %v381
    %v446 = vunpack.c.l.b16 %v382
    %v447 = vunpack.c.l.b16 %v383
    %v448 = vunpack.c.l.b16 %v384
    %v449 = vunpack.c.l.b16 %v385
    %v450 = vunpack.c.l.b16 %v386
    %v451 = vunpack.c.l.b16 %v387
    %v452 = vunpack.c.l.b16 %v388
    %v453 = vunpack.c.l.b16 %v389
    %v454 = vunpack.c.l.b16 %v390
    %v455 = vunpack.c.l.b16 %v391
    %v456 = vunpack.c.l.b16 %v392
    %v457 = vunpack.c.l.b16 %v393
    %v458 = vunpack.c.l.b16 %v394
    %v459 = vunpack.c.l.b16 %v395
    %v460 = vunpack.c.l.b16 %v396
    %v461 = vunpack.c.l.b16 %v397
    %v462 = vunpack.c.l.b16 %v398
    %v463 = vunpack.c.l.b16 %v399
    %v464 = vunpack.c.l.b16 %v400
    %v465 = vunpack.c.l.b16 %v401
    %v466 = vunpack.c.l.b16 %v402
    %v467 = vunpack.c.l.b16 %v403
    %v468 = vpack.c.b16 %v437, %v436
    %v469 = vpack.c.b16 %v439, %v438
    %v470 = vpack.c.b16 %v441, %v440
    %v471 = vpack.c.b16 %v443, %v442
    %v472 = vpack.c.b16 %v445, %v444
    %v473 = vpack.c.b16 %v447, %v446
    %v474 = vpack.c.b16 %v449, %v448
    %v475 = vpack.c.b16 %v451, %v450
    %v476 = vpack.c.b16 %v453, %v452
    %v477 = vpack.c.b16 %v455, %v454
    %v478 = vpack.c.b16 %v457, %v456
    %v479 = vpack.c.b16 %v459, %v458
    %v480 = vpack.c.b16 %v461, %v460
    %v481 = vpack.c.b16 %v463, %v462
    %v482 = vpack.c.b16 %v465, %v464
    %v483 = vpack.c.b16 %v467, %v466
    %500 = vmatprep.subr.bf16.mxu0 0
    %501 = vmatpush1.bf16.msra.mxu0 %v475
    %502 = vmatprep.subr.bf16.mxu0 0
    %503 = vmatpush1.bf16.msra.mxu0 %v474
    %504 = vmatprep.subr.bf16.mxu0 0
    %505 = vmatpush1.bf16.msra.mxu0 %v473
    %506 = vmatprep.subr.bf16.mxu0 0
    %507 = vmatpush1.bf16.msra.mxu0 %v472
    %508 = vmatprep.subr.bf16.mxu0 0
    %509 = vmatpush1.bf16.msra.mxu0 %v471
    %510 = vmatprep.subr.bf16.mxu0 0
    %511 = vmatpush1.bf16.msra.mxu0 %v470
    %512 = vmatprep.subr.bf16.mxu0 0
    %513 = vmatpush1.bf16.msra.mxu0 %v469
    %514 = vmatprep.subr.bf16.mxu0 0
    %515 = vmatpush1.bf16.msra.mxu0 %v468
    %516 = vmatprep.subr.bf16.mxu0 0
    %517 = vmatpush2.bf16.msra.mxu0 %v483
    %518 = vmatprep.subr.bf16.mxu0 0
    %519 = vmatpush2.bf16.msra.mxu0 %v482
    %520 = vmatprep.subr.bf16.mxu0 0
    %521 = vmatpush2.bf16.msra.mxu0 %v481
    %522 = vmatprep.subr.bf16.mxu0 0
    %523 = vmatpush2.bf16.msra.mxu0 %v480
    %524 = vmatprep.subr.bf16.mxu0 0
    %525 = vmatpush2.bf16.msra.mxu0 %v479
    %526 = vmatprep.subr.bf16.mxu0 0
    %527 = vmatpush2.bf16.msra.mxu0 %v478
    %528 = vmatprep.subr.bf16.mxu0 0
    %529 = vmatpush2.bf16.msra.mxu0 %v477
    %530 = vmatprep.subr.bf16.mxu0 0
    %531 = vmatpush2.bf16.msra.mxu0 %v476
    %532 = vmatprep.mubr.bf16.mxu0 %v371
    %533 = vmatmul.mubr.bf16.gmra.mxu0 %v370
    %v534 = vpop.f32.mrf.mxu0
    %v535 = vadd.f32 0.0, %v534
    %v536 = vpop.f32.mrf.mxu0
    %v537 = vpop.f32.mrf.mxu0
    %v538 = vadd.f32 0.0, %v537
    %v539 = vpop.f32.mrf.mxu0
    %540 = vdwg.mxu0
    %v541 = vadd.f32 %v368, %v535
    %v542 = vadd.f32 %v369, %v538
    %543 = vst [vmem:[#allocation2] sm:$0xff] %v541
    %544 = vst [vmem:[#allocation2 + $0x8] sm:$0xff] %v542
    // Predicated region
    $region26: #{feed_forward.1} parent=1 // pred_check
      %p545 = pneg %p44
    $region27: #{feed_forward.1} parent=1 // pred_check_branch
      %547 = sbr.rel (%p545) target = $region29
    $region28: #{feed_forward.1} parent=1 // pred_region
      %v548 = vld [vmem:[#allocation2] sm:$0xff]
      %v549 = vld [vmem:[#allocation2 + $0x8] sm:$0xff]
      %550 = vst [vmem:[#allocation8] sm:$0xff] %v548
      %551 = vst [vmem:[#allocation8 + $0x8] sm:$0xff] %v549
    $region29: #{feed_forward.1} parent=1 // pred_fallthru
      _
    // Predicated region
    $region30: #{feed_forward.1} parent=1 // pred_check
      _
    $region31: #{feed_forward.1} parent=1 // pred_check_branch
      %553 = sbr.rel (0) target = $region33
    $region32: #{feed_forward.1} parent=1 // pred_region
      %s555 = ssub.s32 256, 256
      %556 = vsyncadd [#allocation5], %s555
      %s557 = sshll.u32 [#allocation8], 4
      %s558 = int_to_ptr.vmem [resolvable:$true] %s557
      %563 = dma.vmem_to_hbm [thread:$0]  %s558, 256, %s3, [#allocation5], 128, 128, 8
    $region33: #{feed_forward.1} parent=1 // pred_fallthru
      _
    // Predicated region
    $region34: #{feed_forward.1} parent=1 // pred_check
      _
    $region35: #{feed_forward.1} parent=1 // pred_check_branch
      %565 = sbr.rel (0) target = $region37
    $region36: #{feed_forward.1} parent=1 // pred_region
      %566 = dma.done [#allocation5], 256
    $region37: #{feed_forward.1} parent=1 // pred_fallthru
      _
    %567 = vsyncpa [#allocation4], 1
    %568 = vsyncpa [#allocation7], 1
    %569 = vsyncpa [#allocation5], 1

</llo_original>
